<compile_context>
chip_gen: v5e
topology: v5e:2x2
jax: 0.10.0
libtpu: 0.0.40
codegen_flags: <defaults>
</compile_context>

<pallas_src>
import functools

import jax
import jax.numpy as jnp
from jax.experimental import pallas as pl
from jax.experimental.pallas import tpu as pltpu

IN_SIZE = 35
HIDDEN = 256
NUM_CLASSES = 2
PAD_CLASSES = 128      # lane-dense output width (multiple of 128)
TB_DEFAULT = 1024      # batch-tile rows; small enough for v5e's 16 MiB scoped VMEM


def _round_up(x, m):
    return ((x + m - 1) // m) * m


def _mlp_kernel(x_ref, w1_ref, b1_ref, w2_ref, b2_ref, o_ref):
    # x_ref: (TB, IN_SIZE) bf16   w1_ref: (IN_SIZE, HIDDEN) bf16   b1_ref: (1, HIDDEN) f32
    # w2_ref: (HIDDEN, PAD_CLASSES) bf16 (zero-padded cols)        b2_ref: (1, PAD_CLASSES) f32
    # o_ref: (TB, PAD_CLASSES) f32
    x = x_ref[...]
    h = jnp.dot(x, w1_ref[...], preferred_element_type=jnp.float32) + b1_ref[...]
    h = jnp.maximum(h, 0.0)                                   # ReLU / bias in f32 on the VPU
    logits = jnp.dot(h.astype(jnp.bfloat16), w2_ref[...],
                     preferred_element_type=jnp.float32) + b2_ref[...]
    o_ref[...] = logits


@jax.jit
def mlp_forward(x, w1, b1, w2, b2):
    B = x.shape[0]

    # Lane-dense class padding (extra columns are exactly zero).
    w2p = jnp.zeros((HIDDEN, PAD_CLASSES), jnp.float32).at[:, :NUM_CLASSES].set(w2)
    b2p = jnp.zeros((1, PAD_CLASSES), jnp.float32).at[:, :NUM_CLASSES].set(
        b2.reshape(1, NUM_CLASSES))

    # bf16 matmul operands (f32 accumulation inside the kernel).
    xb = x.astype(jnp.bfloat16)
    w1b = w1.astype(jnp.bfloat16)
    w2b = w2p.astype(jnp.bfloat16)

    # Batch tiling: TB rows per grid step; pad B up so the last tile is full.
    tb = min(TB_DEFAULT, _round_up(B, 8))
    b_pad = _round_up(B, tb)
    if b_pad != B:
        xb = jnp.pad(xb, ((0, b_pad - B), (0, 0)))
    grid = (pl.cdiv(b_pad, tb),)

    flops = 2 * b_pad * (IN_SIZE * HIDDEN + HIDDEN * PAD_CLASSES)
    bytes_accessed = (
        b_pad * IN_SIZE * 2                       # x (bf16)
        + IN_SIZE * HIDDEN * 2 + HIDDEN * 4       # w1 (bf16) + b1 (f32)
        + HIDDEN * PAD_CLASSES * 2 + PAD_CLASSES * 4  # w2 (bf16) + b2 (f32)
        + b_pad * PAD_CLASSES * 4                 # output (f32)
    )

    out_padded = pl.pallas_call(
        _mlp_kernel,
        out_shape=jax.ShapeDtypeStruct((b_pad, PAD_CLASSES), jnp.float32),
        grid_spec=pltpu.PrefetchScalarGridSpec(
            num_scalar_prefetch=0,
            grid=grid,
            in_specs=[
                pl.BlockSpec((tb, IN_SIZE), lambda i: (i, 0)),          # streamed x tiles
                pl.BlockSpec((IN_SIZE, HIDDEN), lambda i: (0, 0)),      # resident weights
                pl.BlockSpec((1, HIDDEN), lambda i: (0, 0)),
                pl.BlockSpec((HIDDEN, PAD_CLASSES), lambda i: (0, 0)),
                pl.BlockSpec((1, PAD_CLASSES), lambda i: (0, 0)),
            ],
            out_specs=pl.BlockSpec((tb, PAD_CLASSES), lambda i: (i, 0)),
        ),
        compiler_params=pltpu.CompilerParams(
            dimension_semantics=("parallel",),
            vmem_limit_bytes=32 * 1024 * 1024,
        ),
        cost_estimate=pl.CostEstimate(
            flops=flops, transcendentals=0, bytes_accessed=bytes_accessed),
    )(xb, w1b, b1, w2b, b2p)

    return out_padded[:B, :NUM_CLASSES]


def cross_entropy_loss(logits, labels, weights=None):
    # Glue (not the hot path): matches torch.nn.CrossEntropyLoss (mean reduction, optional class weights).
    logp = jax.nn.log_softmax(logits, axis=-1)
    nll = -jnp.take_along_axis(logp, labels[:, None], axis=-1)[:, 0]
    if weights is None:
        return jnp.mean(nll)
    w = weights[labels]
    return jnp.sum(w * nll) / jnp.sum(w)


def init_params(key, in_size=IN_SIZE, hidden=HIDDEN, num_classes=NUM_CLASSES):
    # Deterministic init mimicking PyTorch Linear default (uniform +/- 1/sqrt(fan_in)).
    k1, k2, k3, k4 = jax.random.split(key, 4)
    bnd1 = 1.0 / jnp.sqrt(in_size)
    bnd2 = 1.0 / jnp.sqrt(hidden)
    w1 = jax.random.uniform(k1, (in_size, hidden), jnp.float32, -bnd1, bnd1)
    b1 = jax.random.uniform(k2, (1, hidden), jnp.float32, -bnd1, bnd1)
    w2 = jax.random.uniform(k3, (hidden, num_classes), jnp.float32, -bnd2, bnd2)
    b2 = jax.random.uniform(k4, (1, num_classes), jnp.float32, -bnd2, bnd2)
    return w1, b1, w2, b2


if __name__ == "__main__":
    key = jax.random.PRNGKey(0)
    kx, kp, kl = jax.random.split(key, 3)

    B = 8
    x = jax.random.normal(kx, (B, IN_SIZE), jnp.float32)
    w1, b1, w2, b2 = init_params(kp)

    logits = mlp_forward(x, w1, b1, w2, b2)
    logits = jax.block_until_ready(logits)
    assert logits.shape == (B, NUM_CLASSES)

    # Reference 1: plain-JAX with the same bf16 matmul inputs / f32 accumulation (tight tolerance).
    xb = x.astype(jnp.bfloat16)
    h_ref = jnp.maximum(
        jnp.dot(xb, w1.astype(jnp.bfloat16), preferred_element_type=jnp.float32) + b1, 0.0)
    ref_bf16 = jnp.dot(h_ref.astype(jnp.bfloat16), w2.astype(jnp.bfloat16),
                       preferred_element_type=jnp.float32) + b2
    assert jnp.allclose(logits, ref_bf16, atol=1e-3, rtol=1e-3), "mismatch vs bf16 reference"

    # Reference 2: full f32 forward (loose tolerance; guards overall semantics).
    ref_f32 = jnp.maximum(x @ w1 + b1, 0.0) @ w2 + b2
    assert jnp.allclose(logits, ref_f32, atol=5e-2, rtol=5e-2), "mismatch vs f32 reference"

    # Optional labels path (loss computed in plain JAX glue from kernel logits).
    labels = jax.random.randint(kl, (B,), 0, NUM_CLASSES)
    loss = jax.block_until_ready(cross_entropy_loss(logits, labels))
    assert jnp.isfinite(loss)

    print("KERNEL_OK")
</pallas_src>

<mosaic_0001>
module attributes {stable_mosaic.version = 11 : i64} {
  func.func @_mlp_kernel(%arg0: i32, %arg1: memref<8x35xbf16, #tpu.memory_space<vmem>>, %arg2: memref<35x256xbf16, #tpu.memory_space<vmem>>, %arg3: memref<1x256xf32, #tpu.memory_space<vmem>>, %arg4: memref<256x128xbf16, #tpu.memory_space<vmem>>, %arg5: memref<1x128xf32, #tpu.memory_space<vmem>>, %arg6: memref<8x128xf32, #tpu.memory_space<vmem>>) attributes {dimension_semantics = [#tpu.dimension_semantics<parallel>], iteration_bounds = array<i64: 1>, scalar_prefetch = 0 : i64, scratch_operands = 0 : i64, tpu.core_type = #tpu.core_type<tc>, window_params = [{transform_indices = @transform_0, window_bounds = array<i64: 8, 35>}, {pipeline_mode = #tpu.pipeline_mode<synchronous>, transform_indices = @transform_1, window_bounds = array<i64: 35, 256>}, {pipeline_mode = #tpu.pipeline_mode<synchronous>, transform_indices = @transform_2, window_bounds = array<i64: 1, 256>}, {pipeline_mode = #tpu.pipeline_mode<synchronous>, transform_indices = @transform_3, window_bounds = array<i64: 256, 128>}, {pipeline_mode = #tpu.pipeline_mode<synchronous>, transform_indices = @transform_4, window_bounds = array<i64: 1, 128>}, {transform_indices = @transform_5, window_bounds = array<i64: 8, 128>}]} {
    %c0 = arith.constant 0 : index
    %c0_0 = arith.constant 0 : index
    %0 = vector.load %arg1[%c0, %c0_0] : memref<8x35xbf16, #tpu.memory_space<vmem>>, vector<8x35xbf16>
    %c0_1 = arith.constant 0 : index
    %c0_2 = arith.constant 0 : index
    %1 = vector.load %arg2[%c0_1, %c0_2] : memref<35x256xbf16, #tpu.memory_space<vmem>>, vector<35x256xbf16>
    %cst = arith.constant dense<0.000000e+00> : vector<8x256xf32>
    %2 = tpu.matmul %0, %1, %cst {dimension_numbers = #tpu.dot_dimension_numbers<[1], [0], [0], [1], [0, 0, 1, 1], [], []>} : vector<8x35xbf16>, vector<35x256xbf16>, vector<8x256xf32> -> vector<8x256xf32>
    %c0_3 = arith.constant 0 : index
    %c0_4 = arith.constant 0 : index
    %3 = vector.load %arg3[%c0_3, %c0_4] : memref<1x256xf32, #tpu.memory_space<vmem>>, vector<1x256xf32>
    %4 = vector.broadcast %3 : vector<1x256xf32> to vector<8x256xf32>
    %5 = arith.addf %2, %4 : vector<8x256xf32>
    %cst_5 = arith.constant 0.000000e+00 : f32
    %6 = vector.broadcast %cst_5 : f32 to vector<8x256xf32>
    %7 = arith.maximumf %5, %6 : vector<8x256xf32>
    %8 = arith.truncf %7 : vector<8x256xf32> to vector<8x256xbf16>
    %c0_6 = arith.constant 0 : index
    %c0_7 = arith.constant 0 : index
    %9 = vector.load %arg4[%c0_6, %c0_7] : memref<256x128xbf16, #tpu.memory_space<vmem>>, vector<256x128xbf16>
    %cst_8 = arith.constant dense<0.000000e+00> : vector<8x128xf32>
    %10 = tpu.matmul %8, %9, %cst_8 {dimension_numbers = #tpu.dot_dimension_numbers<[1], [0], [0], [1], [0, 0, 1, 1], [], []>} : vector<8x256xbf16>, vector<256x128xbf16>, vector<8x128xf32> -> vector<8x128xf32>
    %c0_9 = arith.constant 0 : index
    %c0_10 = arith.constant 0 : index
    %11 = vector.load %arg5[%c0_9, %c0_10] : memref<1x128xf32, #tpu.memory_space<vmem>>, vector<1x128xf32>
    %12 = vector.broadcast %11 : vector<1x128xf32> to vector<8x128xf32>
    %13 = arith.addf %10, %12 : vector<8x128xf32>
    %c0_11 = arith.constant 0 : index
    %c0_12 = arith.constant 0 : index
    %14 = vector.load %arg6[%c0_11, %c0_12] : memref<8x128xf32, #tpu.memory_space<vmem>>, vector<8x128xf32>
    tpu.vector_store %arg6[%c0_11, %c0_12], %13 {strides = array<i32>} : memref<8x128xf32, #tpu.memory_space<vmem>>, vector<8x128xf32>,
    return
  }
  func.func @transform_0(%arg0: i32) -> (i32, i32) {
    %c0_i32 = arith.constant 0 : i32
    %c0_i32_0 = arith.constant 0 : i32
    return %arg0, %c0_i32 : i32, i32
  }
  func.func @transform_1(%arg0: i32) -> (i32, i32) {
    %c0_i32 = arith.constant 0 : i32
    %c0_i32_0 = arith.constant 0 : i32
    %c0_i32_1 = arith.constant 0 : i32
    return %c0_i32, %c0_i32_0 : i32, i32
  }
  func.func @transform_2(%arg0: i32) -> (i32, i32) {
    %c0_i32 = arith.constant 0 : i32
    %c0_i32_0 = arith.constant 0 : i32
    %c0_i32_1 = arith.constant 0 : i32
    return %c0_i32, %c0_i32_0 : i32, i32
  }
  func.func @transform_3(%arg0: i32) -> (i32, i32) {
    %c0_i32 = arith.constant 0 : i32
    %c0_i32_0 = arith.constant 0 : i32
    %c0_i32_1 = arith.constant 0 : i32
    return %c0_i32, %c0_i32_0 : i32, i32
  }
  func.func @transform_4(%arg0: i32) -> (i32, i32) {
    %c0_i32 = arith.constant 0 : i32
    %c0_i32_0 = arith.constant 0 : i32
    %c0_i32_1 = arith.constant 0 : i32
    return %c0_i32, %c0_i32_0 : i32, i32
  }
  func.func @transform_5(%arg0: i32) -> (i32, i32) {
    %c0_i32 = arith.constant 0 : i32
    %c0_i32_0 = arith.constant 0 : i32
    return %arg0, %c0_i32 : i32, i32
  }
}

</mosaic_0001>

<llo_original>
// kernel: mlp_forward.1
$region0: #{mlp_forward.1}
  #allocation0 [shape = 'u32[]', space=smem, size = 0x4, offset = 0x4, fixed_abs, tag = 'smem constant byte address 0x4 - core index']
  #allocation1 [shape = 'u32[72,128]{1,0:T(1,128)}', space=vmem, size = 0x9000, scoped, tag = 'internal scratch']
  %s0 = inlined_call_operand.vmem [shape: bf16[8,35], index: 0, kind: input, shape index: {}]
  %s1 = inlined_call_operand.vmem [shape: bf16[35,256], index: 1, kind: input, shape index: {}]
  %s2 = inlined_call_operand.vmem [shape: f32[1,256], index: 2, kind: input, shape index: {}]
  %s3 = inlined_call_operand.vmem [shape: bf16[256,128], index: 3, kind: input, shape index: {}]
  %s4 = inlined_call_operand.vmem [shape: f32[1,128], index: 4, kind: input, shape index: {}]
  %s5 = inlined_call_operand.vmem [shape: f32[8,128], index: 5, kind: output, shape index: {}]
  %s6 = sld [smem:[#allocation0]]
  $region30: #{mlp_forward.1} parent=0
    _
  %s8 = ssub.s32 1, %s6
  %s9 = scalar_select 0, %s8, %s6
  // Predicated region
  $region2: #{mlp_forward.1} parent=0 // pred_check
    _
  $region3: #{mlp_forward.1} parent=0 // pred_check_branch
    %11 = sbr.rel (0) target = $region5
  $region4: #{mlp_forward.1} parent=0 // pred_region
    _
  $region5: #{mlp_forward.1} parent=0 // pred_fallthru
    _
  // Predicated region
  $region6: #{mlp_forward.1} parent=0 // pred_check
    _
  $region7: #{mlp_forward.1} parent=0 // pred_check_branch
    %13 = sbr.rel (0) target = $region9
  $region8: #{mlp_forward.1} parent=0 // pred_region
    _
  $region9: #{mlp_forward.1} parent=0 // pred_fallthru
    _
  // Predicated region
  $region10: #{mlp_forward.1} parent=0 // pred_check
    _
  $region11: #{mlp_forward.1} parent=0 // pred_check_branch
    %15 = sbr.rel (0) target = $region13
  $region12: #{mlp_forward.1} parent=0 // pred_region
    _
  $region13: #{mlp_forward.1} parent=0 // pred_fallthru
    _
  // Predicated region
  $region14: #{mlp_forward.1} parent=0 // pred_check
    _
  $region15: #{mlp_forward.1} parent=0 // pred_check_branch
    %17 = sbr.rel (0) target = $region17
  $region16: #{mlp_forward.1} parent=0 // pred_region
    _
  $region17: #{mlp_forward.1} parent=0 // pred_fallthru
    _
  // Predicated region
  $region18: #{mlp_forward.1} parent=0 // pred_check
    _
  $region19: #{mlp_forward.1} parent=0 // pred_check_branch
    %19 = sbr.rel (0) target = $region21
  $region20: #{mlp_forward.1} parent=0 // pred_region
    _
  $region21: #{mlp_forward.1} parent=0 // pred_fallthru
    _
  %v21 = vld [vmem:[%s0] sm:$0xf]
  %v22 = vld [vmem:[%s1] sm:$0xff]
  %v23 = vld [vmem:[%s1 + $0x8] sm:$0xff]
  %v24 = vld [vmem:[%s1 + $0x10] sm:$0xff]
  %v25 = vld [vmem:[%s1 + $0x18] sm:$0xff]
  %v26 = vld [vmem:[%s1 + $0x20] sm:$0x33]
  %v27 = vld [vmem:[%s2] sm:$0x3]
  %v29 = vperm.slane %v27, 0
  %v30 = vperm.slane %v27, 1
  %v38 = vunpack.c.l.b16 %v22
  %v39 = vunpack.c.h.b16 %v22
  %v40 = vunpack.c.l.b16 %v23
  %v41 = vunpack.c.h.b16 %v23
  %v42 = vunpack.c.l.b16 %v24
  %v43 = vunpack.c.h.b16 %v24
  %v44 = vunpack.c.l.b16 %v25
  %v45 = vunpack.c.h.b16 %v25
  %v46 = vunpack.c.l.b16 %v26
  %v47 = vunpack.c.h.b16 %v26
  %v48 = vpack.c.b16 %v40, %v38
  %v49 = vpack.c.b16 %v41, %v39
  %v50 = vpack.c.b16 %v44, %v42
  %v51 = vpack.c.b16 %v45, %v43
  %v52 = vpack.c.b16 %v46, %v46
  %v53 = vpack.c.b16 %v47, %v47
  %vm58 = vcmask 285696
  %v60 = vsel %vm58, %v21, 0
  %vm62 = vcmask 1040384
  %vm63 = vcmask 1041408
  %v64 = vsel %vm62, 4294967295, 65535
  %v65 = vsel %vm63, %v64, 0
  %v67 = vand.u32 %v52, %v65
  %v70 = vand.u32 %v53, %v65
  %72 = vmatpush.bf16.msra.mxu0 0
  %73 = vmatpush.bf16.msra.mxu0 0
  %74 = vmatpush.bf16.msra.mxu0 0
  %75 = vmatpush.bf16.msra.mxu0 0
  %76 = vmatpush.bf16.msra.mxu0 0
  %77 = vmatpush.bf16.msra.mxu0 %v67
  %78 = vmatpush.bf16.msra.mxu0 %v50
  %79 = vmatpush.bf16.msra.mxu0 %v48
  %80 = vmatmul.bf16.gmra.mxu0 %v60
  %v81 = vpop.f32.mrf.mxu0
  %v82 = vadd.f32 %v29, %v81
  %v83 = vpop.f32.mrf.mxu0
  %84 = vdwg.mxu0
  %85 = vmatpush.bf16.msra.mxu0 0
  %86 = vmatpush.bf16.msra.mxu0 0
  %87 = vmatpush.bf16.msra.mxu0 0
  %88 = vmatpush.bf16.msra.mxu0 0
  %89 = vmatpush.bf16.msra.mxu0 0
  %90 = vmatpush.bf16.msra.mxu0 %v70
  %91 = vmatpush.bf16.msra.mxu0 %v51
  %92 = vmatpush.bf16.msra.mxu0 %v49
  %93 = vmatmul.bf16.gmra.mxu0 %v60
  %v94 = vpop.f32.mrf.mxu0
  %v95 = vadd.f32 %v30, %v94
  %v96 = vpop.f32.mrf.mxu0
  %97 = vdwg.mxu0
  %v98 = vmax.f32 %v82, 0.0
  %v99 = vmax.f32 %v95, 0.0
  %v100 = vpack.c.bf16 %v98, %v98
  %v101 = vpack.c.bf16 %v99, %v99
  %v102 = vld [vmem:[%s3] sm:$0xf]
  %v103 = vld [vmem:[%s3 + $0x4] sm:$0xf]
  %v104 = vld [vmem:[%s3 + $0x8] sm:$0xf]
  %v105 = vld [vmem:[%s3 + $0xc] sm:$0xf]
  %v106 = vld [vmem:[%s3 + $0x10] sm:$0xf]
  %v107 = vld [vmem:[%s3 + $0x14] sm:$0xf]
  %v108 = vld [vmem:[%s3 + $0x18] sm:$0xf]
  %v109 = vld [vmem:[%s3 + $0x1c] sm:$0xf]
  %v110 = vld [vmem:[%s3 + $0x20] sm:$0xf]
  %v111 = vld [vmem:[%s3 + $0x24] sm:$0xf]
  %v112 = vld [vmem:[%s3 + $0x28] sm:$0xf]
  %v113 = vld [vmem:[%s3 + $0x2c] sm:$0xf]
  %v114 = vld [vmem:[%s3 + $0x30] sm:$0xf]
  %v115 = vld [vmem:[%s3 + $0x34] sm:$0xf]
  %v116 = vld [vmem:[%s3 + $0x38] sm:$0xf]
  %v117 = vld [vmem:[%s3 + $0x3c] sm:$0xf]
  %v118 = vld [vmem:[%s3 + $0x40] sm:$0xf]
  %v119 = vld [vmem:[%s3 + $0x44] sm:$0xf]
  %v120 = vld [vmem:[%s3 + $0x48] sm:$0xf]
  %v121 = vld [vmem:[%s3 + $0x4c] sm:$0xf]
  %v122 = vld [vmem:[%s3 + $0x50] sm:$0xf]
  %v123 = vld [vmem:[%s3 + $0x54] sm:$0xf]
  %v124 = vld [vmem:[%s3 + $0x58] sm:$0xf]
  %v125 = vld [vmem:[%s3 + $0x5c] sm:$0xf]
  %v126 = vld [vmem:[%s3 + $0x60] sm:$0xf]
  %v127 = vld [vmem:[%s3 + $0x64] sm:$0xf]
  %v128 = vld [vmem:[%s3 + $0x68] sm:$0xf]
  %v129 = vld [vmem:[%s3 + $0x6c] sm:$0xf]
  %v130 = vld [vmem:[%s3 + $0x70] sm:$0xf]
  %v131 = vld [vmem:[%s3 + $0x74] sm:$0xf]
  %v132 = vld [vmem:[%s3 + $0x78] sm:$0xf]
  %v133 = vld [vmem:[%s3 + $0x7c] sm:$0xf]
  %v134 = vld [vmem:[%s4] sm:$0x1]
  %v136 = vperm.slane %v134, 0
  %v170 = vunpack.c.l.b16 %v102
  %v171 = vunpack.c.l.b16 %v103
  %v172 = vunpack.c.l.b16 %v104
  %v173 = vunpack.c.l.b16 %v105
  %v174 = vunpack.c.l.b16 %v106
  %v175 = vunpack.c.l.b16 %v107
  %v176 = vunpack.c.l.b16 %v108
  %v177 = vunpack.c.l.b16 %v109
  %v178 = vunpack.c.l.b16 %v110
  %v179 = vunpack.c.l.b16 %v111
  %v180 = vunpack.c.l.b16 %v112
  %v181 = vunpack.c.l.b16 %v113
  %v182 = vunpack.c.l.b16 %v114
  %v183 = vunpack.c.l.b16 %v115
  %v184 = vunpack.c.l.b16 %v116
  %v185 = vunpack.c.l.b16 %v117
  %v186 = vunpack.c.l.b16 %v118
  %v187 = vunpack.c.l.b16 %v119
  %v188 = vunpack.c.l.b16 %v120
  %v189 = vunpack.c.l.b16 %v121
  %v190 = vunpack.c.l.b16 %v122
  %v191 = vunpack.c.l.b16 %v123
  %v192 = vunpack.c.l.b16 %v124
  %v193 = vunpack.c.l.b16 %v125
  %v194 = vunpack.c.l.b16 %v126
  %v195 = vunpack.c.l.b16 %v127
  %v196 = vunpack.c.l.b16 %v128
  %v197 = vunpack.c.l.b16 %v129
  %v198 = vunpack.c.l.b16 %v130
  %v199 = vunpack.c.l.b16 %v131
  %v200 = vunpack.c.l.b16 %v132
  %v201 = vunpack.c.l.b16 %v133
  %v202 = vpack.c.b16 %v171, %v170
  %v203 = vpack.c.b16 %v173, %v172
  %v204 = vpack.c.b16 %v175, %v174
  %v205 = vpack.c.b16 %v177, %v176
  %v206 = vpack.c.b16 %v179, %v178
  %v207 = vpack.c.b16 %v181, %v180
  %v208 = vpack.c.b16 %v183, %v182
  %v209 = vpack.c.b16 %v185, %v184
  %v210 = vpack.c.b16 %v187, %v186
  %v211 = vpack.c.b16 %v189, %v188
  %v212 = vpack.c.b16 %v191, %v190
  %v213 = vpack.c.b16 %v193, %v192
  %v214 = vpack.c.b16 %v195, %v194
  %v215 = vpack.c.b16 %v197, %v196
  %v216 = vpack.c.b16 %v199, %v198
  %v217 = vpack.c.b16 %v201, %v200
  %234 = vmatpush.bf16.msra.mxu0 %v209
  %235 = vmatpush.bf16.msra.mxu0 %v208
  %236 = vmatpush.bf16.msra.mxu0 %v207
  %237 = vmatpush.bf16.msra.mxu0 %v206
  %238 = vmatpush.bf16.msra.mxu0 %v205
  %239 = vmatpush.bf16.msra.mxu0 %v204
  %240 = vmatpush.bf16.msra.mxu0 %v203
  %241 = vmatpush.bf16.msra.mxu0 %v202
  %242 = vmatmul.bf16.gmra.mxu0 %v100
  %v243 = vpop.f32.mrf.mxu0
  %v244 = vadd.f32 %v136, %v243
  %v245 = vpop.f32.mrf.mxu0
  %246 = vdwg.mxu0
  %247 = vmatpush.bf16.msra.mxu0 %v217
  %248 = vmatpush.bf16.msra.mxu0 %v216
  %249 = vmatpush.bf16.msra.mxu0 %v215
  %250 = vmatpush.bf16.msra.mxu0 %v214
  %251 = vmatpush.bf16.msra.mxu0 %v213
  %252 = vmatpush.bf16.msra.mxu0 %v212
  %253 = vmatpush.bf16.msra.mxu0 %v211
  %254 = vmatpush.bf16.msra.mxu0 %v210
  %255 = vmatmul.bf16.gmra.mxu0 %v101
  %v256 = vpop.f32.mrf.mxu0
  %v257 = vadd.f32 %v244, %v256
  %v258 = vpop.f32.mrf.mxu0
  %259 = vdwg.mxu0
  %260 = vst [vmem:[%s5] sm:$0xff] %v257
  // Predicated region
  $region22: #{mlp_forward.1} parent=0 // pred_check
    _
  $region23: #{mlp_forward.1} parent=0 // pred_check_branch
    %262 = sbr.rel (0) target = $region25
  $region24: #{mlp_forward.1} parent=0 // pred_region
    _
  $region25: #{mlp_forward.1} parent=0 // pred_fallthru
    _
  // Predicated region
  $region26: #{mlp_forward.1} parent=0 // pred_check
    _
  $region27: #{mlp_forward.1} parent=0 // pred_check_branch
    %264 = sbr.rel (0) target = $region29
  $region28: #{mlp_forward.1} parent=0 // pred_region
    _
  $region29: #{mlp_forward.1} parent=0 // pred_fallthru
    _

</llo_original>
